<compile_context>
chip_gen: v7x
topology: tpu7x:2x2x1
jax: 0.10.0
libtpu: 0.0.40
codegen_flags: <defaults>
</compile_context>

<pallas_src>
import functools

import jax
import jax.numpy as jnp
from jax import lax
from jax.experimental import pallas as pl
from jax.experimental.pallas import tpu as pltpu

_LANE = 128
_SUBLANE = 8
# Below this x size a 1-step fused grid is fine (DMA time negligible); above it
# a 1-step grid has fully exposed DMA and we route to the pipelined 2-D scheme.
_MIN_PIPELINE_BYTES = 8 * 1024 * 1024


def _round_up(x, m):
    return ((x + m - 1) // m) * m


def _cdiv(a, b):
    return -(-a // b)


@functools.lru_cache(maxsize=1)
def _hw_plan():
    """(vmem_budget_bytes, vmem_limit_bytes, multi_core) for the local TPU generation."""
    try:
        info = pltpu.get_tpu_info()
        cap = int(info.vmem_capacity_bytes)
        cores = getattr(info, "num_cores", None) or getattr(info, "tensorcores_per_chip", None)
        if cores is not None:
            multi_core = int(cores) > 1
        else:
            # Heuristic: v7x exposes 64 MiB VMEM per TensorCore (2 TCs/chip);
            # v5e/v6e expose 128 MiB with a single TC.
            multi_core = cap <= 64 * 1024 * 1024
        budget = (cap * 5) // 8   # v7x ~40 MiB, v5e/v6e ~80 MiB
        limit = (cap * 3) // 4    # v7x ~48 MiB, v5e/v6e ~96 MiB
        return budget, limit, multi_core
    except Exception:
        # Conservative fallback (fits every generation's default scoped budget).
        return 24 * 1024 * 1024, 32 * 1024 * 1024, False


# ----------------------------------------------------------------------------
# Kernels
# ----------------------------------------------------------------------------
def _bn_fused_kernel(x_ref, u_ref, mean_ref, var_ref, *, eps, inv_n):
    """Single-pass kernel: whole batch resident, one (N, td) column slab."""
    # Mean reduction consumes the x load directly (no long-lived f32 copy of x).
    mean = jnp.sum(x_ref[...].astype(jnp.float32), axis=0, keepdims=True) * inv_n  # (1, td)
    # Centered second pass over the VMEM-resident block (numerically robust).
    diff = x_ref[...].astype(jnp.float32) - mean                                    # (N, td)
    var = jnp.sum(diff * diff, axis=0, keepdims=True) * inv_n + eps
    inv_std = lax.rsqrt(var)                                                        # (1, td) on EUP
    u_ref[...] = (diff * inv_std).astype(u_ref.dtype)                               # one VPU multiply
    mean_ref[...] = mean
    var_ref[...] = var


def _bn_stats_kernel(x_ref, mean_ref, var_ref, shift_sc, sum_sc, sumsq_sc,
                     *, eps, inv_n, n_rows, tn):
    """Two-pass fallback, pass 1: shifted sum / sum-of-squares over N chunks.

    Ragged batch rows (beyond the true n_rows) are masked in-kernel, so x needs
    no zero-padding. Shifting by the first batch row of each column avoids the
    E[x^2] - E[x]^2 cancellation.
    """
    i = pl.program_id(1)  # reduction axis (last)

    @pl.when(i == 0)
    def _():
        shift_sc[...] = x_ref[0:1, :].astype(jnp.float32)  # row 0 is always valid
        sum_sc[...] = jnp.zeros_like(sum_sc)
        sumsq_sc[...] = jnp.zeros_like(sumsq_sc)

    xs = x_ref[...].astype(jnp.float32) - shift_sc[...]
    row = i * tn + lax.broadcasted_iota(jnp.int32, xs.shape, 0)
    xs = jnp.where(row < n_rows, xs, 0.0)                  # mask ragged batch rows
    sum_sc[...] += jnp.sum(xs, axis=0, keepdims=True)
    sumsq_sc[...] += jnp.sum(xs * xs, axis=0, keepdims=True)

    @pl.when(i == pl.num_programs(1) - 1)
    def _():
        m_sh = sum_sc[...] * inv_n
        mean_ref[...] = shift_sc[...] + m_sh
        var_ref[...] = sumsq_sc[...] * inv_n - m_sh * m_sh + eps


def _bn_normalize_kernel(x_ref, mean_ref, var_ref, u_ref):
    """Two-pass fallback, pass 2: elementwise normalization (pure HBM stream)."""
    inv_std = lax.rsqrt(var_ref[...])
    u_ref[...] = ((x_ref[...].astype(jnp.float32) - mean_ref[...]) * inv_std).astype(u_ref.dtype)


# ----------------------------------------------------------------------------
# Tile planning
# ----------------------------------------------------------------------------
def _split_for_cores(td, d_ceil, want_tiles):
    """On multi-TensorCore chips, give the 'parallel' D axis >= want_tiles tiles."""
    tgt = min(want_tiles, d_ceil // _LANE)
    if tgt <= 1 or _cdiv(d_ceil, td) >= tgt:
        return td
    return _round_up(_cdiv(d_ceil, tgt), _LANE)


def _plan_tiles(N, D, itemsize, budget, multi_core, force_two_pass=False):
    """Returns ('fused', td) or ('two_pass', td, tn). td is a multiple of 128, tn of 8."""
    d_ceil = _round_up(D, _LANE)

    if not force_two_pass:
        # Per lane column of one fused grid step:
        #   2x double-buffered input + 2x double-buffered output blocks
        #   + one full-block f32 temporary (diff) + transient reduction vregs.
        per_lane = N * (4 * itemsize + 8) + 64
        max_td = (budget // per_lane) // _LANE * _LANE
        if max_td >= _LANE:
            td = min(max_td, d_ceil)
            td = _round_up(_cdiv(d_ceil, _cdiv(d_ceil, td)), _LANE)  # balance tiles
            if multi_core:
                td = _split_for_cores(td, d_ceil, want_tiles=4)
            if _cdiv(D, td) > 1 or N * D * itemsize < _MIN_PIPELINE_BYTES:
                return ("fused", td)
            # else: a single-step grid over a large slab exposes all DMA; fall
            # through to the 2-D two-pass scheme so the x stream overlaps compute.

    td = min(512, d_ceil)
    td = _round_up(_cdiv(d_ceil, _cdiv(d_ceil, td)), _LANE)
    if multi_core:
        td = _split_for_cores(td, d_ceil, want_tiles=2)
    per_row = td * (4 * itemsize + 8)
    tn_max = max(_SUBLANE, (budget // per_row) // _SUBLANE * _SUBLANE)
    tn_max = min(tn_max, _round_up(N, _SUBLANE))
    tn = _round_up(_cdiv(N, _cdiv(N, tn_max)), _SUBLANE)  # balanced N chunks, no pad
    return ("two_pass", td, tn)


# ----------------------------------------------------------------------------
# Wrappers around pallas_call
# ----------------------------------------------------------------------------
def _fused_forward(x, eps, td, vmem_limit):
    N, D = x.shape
    grid = (_cdiv(D, td),)

    kernel = functools.partial(_bn_fused_kernel, eps=eps, inv_n=1.0 / N)
    u, mean, var = pl.pallas_call(
        kernel,
        out_shape=(
            jax.ShapeDtypeStruct((N, D), x.dtype),
            jax.ShapeDtypeStruct((1, D), jnp.float32),
            jax.ShapeDtypeStruct((1, D), jnp.float32),
        ),
        grid_spec=pltpu.PrefetchScalarGridSpec(
            num_scalar_prefetch=0,
            grid=grid,
            in_specs=[pl.BlockSpec((N, td), lambda j: (0, j))],
            out_specs=(
                pl.BlockSpec((N, td), lambda j: (0, j)),
                pl.BlockSpec((1, td), lambda j: (0, j)),
                pl.BlockSpec((1, td), lambda j: (0, j)),
            ),
        ),
        compiler_params=pltpu.CompilerParams(
            dimension_semantics=("parallel",),
            vmem_limit_bytes=vmem_limit,
        ),
    )(x)
    return u, mean[0], var[0]


def _two_pass_forward(x, eps, td, tn, vmem_limit):
    N, D = x.shape
    grid = (_cdiv(D, td), _cdiv(N, tn))

    stats_kernel = functools.partial(
        _bn_stats_kernel, eps=eps, inv_n=1.0 / N, n_rows=N, tn=tn)
    mean, var = pl.pallas_call(
        stats_kernel,
        out_shape=(
            jax.ShapeDtypeStruct((1, D), jnp.float32),
            jax.ShapeDtypeStruct((1, D), jnp.float32),
        ),
        grid_spec=pltpu.PrefetchScalarGridSpec(
            num_scalar_prefetch=0,
            grid=grid,
            in_specs=[pl.BlockSpec((tn, td), lambda j, i: (i, j))],
            out_specs=(
                pl.BlockSpec((1, td), lambda j, i: (0, j)),
                pl.BlockSpec((1, td), lambda j, i: (0, j)),
            ),
            scratch_shapes=[
                pltpu.VMEM((1, td), jnp.float32),   # shift
                pltpu.VMEM((1, td), jnp.float32),   # sum
                pltpu.VMEM((1, td), jnp.float32),   # sum of squares
            ],
        ),
        compiler_params=pltpu.CompilerParams(
            dimension_semantics=("parallel", "arbitrary"),
            vmem_limit_bytes=vmem_limit,
        ),
    )(x)

    u = pl.pallas_call(
        _bn_normalize_kernel,
        out_shape=jax.ShapeDtypeStruct((N, D), x.dtype),
        grid_spec=pltpu.PrefetchScalarGridSpec(
            num_scalar_prefetch=0,
            grid=grid,
            in_specs=[
                pl.BlockSpec((tn, td), lambda j, i: (i, j)),
                pl.BlockSpec((1, td), lambda j, i: (0, j)),
                pl.BlockSpec((1, td), lambda j, i: (0, j)),
            ],
            out_specs=pl.BlockSpec((tn, td), lambda j, i: (i, j)),
        ),
        compiler_params=pltpu.CompilerParams(
            dimension_semantics=("parallel", "parallel"),
            vmem_limit_bytes=vmem_limit,
        ),
    )(x, mean, var)
    return u, mean[0], var[0]


def batch_norm_forward(x, *, eps=1e-5, force_two_pass=False):
    """Training-mode BatchNorm forward. Returns (u, mean, var); mean/var are (D,) f32."""
    N, D = x.shape
    budget, limit, multi_core = _hw_plan()
    plan = _plan_tiles(N, D, x.dtype.itemsize, budget, multi_core, force_two_pass)
    if plan[0] == "fused":
        return _fused_forward(x, eps, plan[1], limit)
    return _two_pass_forward(x, eps, plan[1], plan[2], limit)


# ----------------------------------------------------------------------------
# Module port
# ----------------------------------------------------------------------------
class BatchNorm:
    """JAX/Pallas port of the PyTorch BatchNorm module (forward + inverse)."""

    def __init__(self, n_units, alpha=0.1, eps=1e-5):
        self.n_units = n_units
        self.alpha = alpha
        self.eps = eps
        self.mean = None
        self.var = None
        self.running_mean = None
        self.running_var = None

    def forward(self, x, fixed_params=False):
        if fixed_params:
            # Running-stats path: trivial elementwise op, kept in plain JAX
            # (no batch reduction to fuse).
            self.mean = self.running_mean
            self.var = self.running_var
            return (x - self.mean) / jnp.sqrt(self.var)

        u, mean, var = batch_norm_forward(x, eps=self.eps)
        self.mean, self.var = mean, var
        # TODO(synk): EMA bookkeeping kept in plain JAX; mutates Python state,
        # not jit/scan-friendly (matches the original module's semantics).
        if self.running_mean is None:
            self.running_mean = jnp.zeros(self.n_units, jnp.float32) + mean
            self.running_var = jnp.zeros(self.n_units, jnp.float32) + var
        else:
            self.running_mean = (1.0 - self.alpha) * self.running_mean + self.alpha * mean
            self.running_var = (1.0 - self.alpha) * self.running_var + self.alpha * var
        return u

    def inverse(self, u):
        return jnp.sqrt(self.running_var) * u + self.running_mean


if __name__ == "__main__":
    key = jax.random.PRNGKey(0)

    def ref_forward(x, eps=1e-5):
        m = jnp.mean(x, axis=0)
        v = jnp.mean((x - m) ** 2, axis=0) + eps
        return (x - m) / jnp.sqrt(v), m, v

    # 1) Small aligned shape through the fused path (batch=8, n_units=32).
    N, D = 8, 32
    x = jax.random.normal(key, (N, D), dtype=jnp.float32)
    bn = BatchNorm(n_units=D, alpha=0.1, eps=1e-5)
    u = jax.block_until_ready(bn.forward(x))
    u_ref, m_ref, v_ref = ref_forward(x)
    assert u.shape == (N, D) and u.dtype == x.dtype
    assert jnp.allclose(u, u_ref, atol=1e-5, rtol=1e-5), "fused path mismatch vs reference"
    assert jnp.allclose(bn.mean, m_ref, atol=1e-6, rtol=1e-6)
    assert jnp.allclose(bn.var, v_ref, atol=1e-6, rtol=1e-6)

    # 2) Ragged D (not a multiple of 128): exercises pad-free masked lane stores.
    x2 = jax.random.normal(jax.random.PRNGKey(1), (16, 200), dtype=jnp.float32)
    u2, m2, v2 = batch_norm_forward(x2, eps=1e-5)
    u2 = jax.block_until_ready(u2)
    u2_ref, m2_ref, v2_ref = ref_forward(x2)
    assert u2.shape == x2.shape
    assert jnp.allclose(u2, u2_ref, atol=1e-5, rtol=1e-5), "ragged-D fused mismatch"
    assert jnp.allclose(m2, m2_ref, atol=1e-5, rtol=1e-5)
    assert jnp.allclose(v2, v2_ref, atol=1e-5, rtol=1e-5)

    # 3) Ragged N + ragged D through the two-pass fallback (row-masked, shifted sums).
    x3 = jax.random.normal(jax.random.PRNGKey(2), (20, 200), dtype=jnp.float32) + 3.0
    u3, m3, v3 = batch_norm_forward(x3, eps=1e-5, force_two_pass=True)
    u3 = jax.block_until_ready(u3)
    u3_ref, m3_ref, v3_ref = ref_forward(x3)
    assert jnp.allclose(u3, u3_ref, atol=1e-4, rtol=1e-4), "two-pass path mismatch"
    assert jnp.allclose(m3, m3_ref, atol=1e-4, rtol=1e-4)
    assert jnp.allclose(v3, v3_ref, atol=1e-4, rtol=1e-4)

    # 4) Second forward exercises the EMA running-stats update + inverse().
    u4 = jax.block_until_ready(bn.forward(x + 1.0))
    assert u4.shape == (N, D)
    x_back = jax.block_until_ready(bn.inverse(u4))
    assert x_back.shape == (N, D)

    print("KERNEL_OK")
</pallas_src>

<mosaic_0001>
module attributes {stable_mosaic.version = 11 : i64} {
  func.func @_bn_fused_kernel(%arg0: i32, %arg1: memref<8x128xf32, #tpu.memory_space<vmem>>, %arg2: memref<8x128xf32, #tpu.memory_space<vmem>>, %arg3: memref<1x128xf32, #tpu.memory_space<vmem>>, %arg4: memref<1x128xf32, #tpu.memory_space<vmem>>) attributes {dimension_semantics = [#tpu.dimension_semantics<parallel>], iteration_bounds = array<i64: 1>, scalar_prefetch = 0 : i64, scratch_operands = 0 : i64, tpu.core_type = #tpu.core_type<tc>, window_params = [{transform_indices = @transform_0, window_bounds = array<i64: 8, 128>}, {transform_indices = @transform_1, window_bounds = array<i64: 8, 128>}, {transform_indices = @transform_2, window_bounds = array<i64: 1, 128>}, {transform_indices = @transform_3, window_bounds = array<i64: 1, 128>}]} {
    %c0 = arith.constant 0 : index
    %c0_0 = arith.constant 0 : index
    %0 = vector.load %arg1[%c0, %c0_0] : memref<8x128xf32, #tpu.memory_space<vmem>>, vector<8x128xf32>
    %cst = arith.constant dense<0.000000e+00> : vector<128xf32>
    %1 = vector.multi_reduction <add>, %0, %cst [0] : vector<8x128xf32> to vector<128xf32>
    %2 = vector.shape_cast %1 : vector<128xf32> to vector<1x128xf32>
    %cst_1 = arith.constant 1.250000e-01 : f32
    %3 = vector.broadcast %cst_1 : f32 to vector<1x128xf32>
    %4 = arith.mulf %2, %3 : vector<1x128xf32>
    %c0_2 = arith.constant 0 : index
    %c0_3 = arith.constant 0 : index
    %5 = vector.load %arg1[%c0_2, %c0_3] : memref<8x128xf32, #tpu.memory_space<vmem>>, vector<8x128xf32>
    %6 = vector.broadcast %4 : vector<1x128xf32> to vector<8x128xf32>
    %7 = arith.subf %5, %6 : vector<8x128xf32>
    %8 = arith.mulf %7, %7 : vector<8x128xf32>
    %cst_4 = arith.constant dense<0.000000e+00> : vector<128xf32>
    %9 = vector.multi_reduction <add>, %8, %cst_4 [0] : vector<8x128xf32> to vector<128xf32>
    %10 = vector.shape_cast %9 : vector<128xf32> to vector<1x128xf32>
    %cst_5 = arith.constant 1.250000e-01 : f32
    %11 = vector.broadcast %cst_5 : f32 to vector<1x128xf32>
    %12 = arith.mulf %10, %11 : vector<1x128xf32>
    %cst_6 = arith.constant 9.99999974E-6 : f32
    %13 = vector.broadcast %cst_6 : f32 to vector<1x128xf32>
    %14 = arith.addf %12, %13 : vector<1x128xf32>
    %15 = math.rsqrt %14 : vector<1x128xf32>
    %16 = vector.broadcast %15 : vector<1x128xf32> to vector<8x128xf32>
    %17 = arith.mulf %7, %16 : vector<8x128xf32>
    %c0_7 = arith.constant 0 : index
    %c0_8 = arith.constant 0 : index
    %18 = vector.load %arg2[%c0_7, %c0_8] : memref<8x128xf32, #tpu.memory_space<vmem>>, vector<8x128xf32>
    tpu.vector_store %arg2[%c0_7, %c0_8], %17 {strides = array<i32>} : memref<8x128xf32, #tpu.memory_space<vmem>>, vector<8x128xf32>,
    %c0_9 = arith.constant 0 : index
    %c0_10 = arith.constant 0 : index
    %19 = vector.load %arg3[%c0_9, %c0_10] : memref<1x128xf32, #tpu.memory_space<vmem>>, vector<1x128xf32>
    tpu.vector_store %arg3[%c0_9, %c0_10], %4 {strides = array<i32>} : memref<1x128xf32, #tpu.memory_space<vmem>>, vector<1x128xf32>,
    %c0_11 = arith.constant 0 : index
    %c0_12 = arith.constant 0 : index
    %20 = vector.load %arg4[%c0_11, %c0_12] : memref<1x128xf32, #tpu.memory_space<vmem>>, vector<1x128xf32>
    tpu.vector_store %arg4[%c0_11, %c0_12], %14 {strides = array<i32>} : memref<1x128xf32, #tpu.memory_space<vmem>>, vector<1x128xf32>,
    return
  }
  func.func @transform_0(%arg0: i32) -> (i32, i32) {
    %c0_i32 = arith.constant 0 : i32
    %c0_i32_0 = arith.constant 0 : i32
    return %c0_i32, %arg0 : i32, i32
  }
  func.func @transform_1(%arg0: i32) -> (i32, i32) {
    %c0_i32 = arith.constant 0 : i32
    %c0_i32_0 = arith.constant 0 : i32
    return %c0_i32, %arg0 : i32, i32
  }
  func.func @transform_2(%arg0: i32) -> (i32, i32) {
    %c0_i32 = arith.constant 0 : i32
    %c0_i32_0 = arith.constant 0 : i32
    return %c0_i32, %arg0 : i32, i32
  }
  func.func @transform_3(%arg0: i32) -> (i32, i32) {
    %c0_i32 = arith.constant 0 : i32
    %c0_i32_0 = arith.constant 0 : i32
    return %c0_i32, %arg0 : i32, i32
  }
}

</mosaic_0001>

<llo_original>
// kernel: tpu_custom_call.1
$region0: #{tpu_custom_call.1}
  #allocation0 [shape = 'u32[]', space=smem, size = 0x4, offset = 0x4, fixed_abs, tag = 'smem constant byte address 0x4 - core index']
  #allocation1 [shape = 'u32[144,128]{1,0:T(1,128)}', space=vmem, size = 0x12000, scoped, tag = 'internal scratch']
  %s0 = inlined_call_operand.hbm [shape: f32[8,32], index: 0, kind: input, shape index: {}]
  %s1 = inlined_call_operand.hbm [shape: f32[8,32], index: 1, kind: output, shape index: {0}]
  %s2 = inlined_call_operand.hbm [shape: f32[1,32], index: 2, kind: output, shape index: {1}]
  %s3 = inlined_call_operand.hbm [shape: f32[1,32], index: 3, kind: output, shape index: {2}]
  %4 = xla_tuple %s1, %s2, %s3
  %s5 = sld [smem:[#allocation0]]
  $region34: #{tpu_custom_call.1} parent=0
    _
  %s7 = ssub.s32 1, %s5
  %s8 = scalar_select 0, %s7, %s5
  $region1: #{tpu_custom_call.1} parent=0
    #allocation2 [shape = 'u8[4096]{0}', space=vmem, size = 0x1000, scoped, tag = 'input window, operand 0, single buffered']
    #allocation3 [shape = 's32[1]{0}', space=sflag, size = 0x4, scoped, tag = 'scoped memory for tpu_custom_call.1']
    #allocation4 [shape = 's32[1]{0}', space=sflag, size = 0x4, scoped, tag = 'scoped memory for tpu_custom_call.1']
    #allocation5 [shape = 'u8[4096]{0}', space=vmem, size = 0x1000, scoped, tag = 'output window, operand 0, single buffered']
    #allocation6 [shape = 'u8[512]{0}', space=vmem, size = 0x400, scoped, tag = 'output window, operand 1, single buffered']
    #allocation7 [shape = 's32[1]{0}', space=sflag, size = 0x4, scoped, tag = 'scoped memory for tpu_custom_call.1']
    #allocation8 [shape = 'u8[512]{0}', space=vmem, size = 0x400, scoped, tag = 'output window, operand 2, single buffered']
    %9 = vsyncpa [#allocation3], 0
    %10 = vsyncpa [#allocation4], 0
    %11 = vsyncpa [#allocation7], 0
    // Predicated region
    $region2: #{tpu_custom_call.1} parent=1 // pred_check
      _
    $region3: #{tpu_custom_call.1} parent=1 // pred_check_branch
      %13 = sbr.rel (0) target = $region5
    $region4: #{tpu_custom_call.1} parent=1 // pred_region
      %s15 = ssub.s32 128, 128
      %16 = vsyncadd [#allocation3], %s15
      %s18 = sshll.u32 [#allocation2], 4
      %s19 = int_to_ptr.vmem [resolvable:$true] %s18
      %21 = dma.hbm_to_vmem [thread:$0]  %s0, 128, %s19, [#allocation3]
    $region5: #{tpu_custom_call.1} parent=1 // pred_fallthru
      _
    // Predicated region
    $region6: #{tpu_custom_call.1} parent=1 // pred_check
      _
    $region7: #{tpu_custom_call.1} parent=1 // pred_check_branch
      %23 = sbr.rel (0) target = $region9
    $region8: #{tpu_custom_call.1} parent=1 // pred_region
      %24 = dma.done [#allocation3], 128
    $region9: #{tpu_custom_call.1} parent=1 // pred_fallthru
      _
    %v25 = vld [vmem:[#allocation2] sm:$0xff]
    %v26 = vrot.slane %v25, 4
    %v27 = vadd.f32 %v25, %v26
    %v28 = vrot.slane %v27, 2
    %v29 = vadd.f32 %v27, %v28
    %v30 = vrot.slane %v29, 1
    %v31 = vadd.f32 %v29, %v30
    %v32 = vmul.f32 %v31, 0.125
    %v33 = vsub.f32 %v25, %v32
    %v34 = vmul.f32 %v33, %v33
    %v35 = vrot.slane %v34, 4
    %v36 = vadd.f32 %v34, %v35
    %v37 = vrot.slane %v36, 2
    %v38 = vadd.f32 %v36, %v37
    %v39 = vrot.slane %v38, 1
    %v40 = vadd.f32 %v38, %v39
    %v41 = vmul.f32 %v40, 0.125
    %v42 = vadd.f32 %v41, 1e-05
    %v43 = vrsqrt.pop %v42
    %v44 = vmul.f32 %v33, %v43
    %45 = vst [vmem:[#allocation5] sm:$0xff] %v44
    %46 = vst [vmem:[#allocation6] sm:$0x1] %v32
    %47 = vst [vmem:[#allocation8] sm:$0x1] %v42
    // Predicated region
    $region10: #{tpu_custom_call.1} parent=1 // pred_check
      _
    $region11: #{tpu_custom_call.1} parent=1 // pred_check_branch
      %49 = sbr.rel (0) target = $region13
    $region12: #{tpu_custom_call.1} parent=1 // pred_region
      %s51 = ssub.s32 128, 128
      %52 = vsyncadd [#allocation4], %s51
      %s54 = sshll.u32 [#allocation5], 4
      %s55 = int_to_ptr.vmem [resolvable:$true] %s54
      %57 = dma.vmem_to_hbm [thread:$0]  %s55, 128, %s1, [#allocation4]
    $region13: #{tpu_custom_call.1} parent=1 // pred_fallthru
      _
    // Predicated region
    $region14: #{tpu_custom_call.1} parent=1 // pred_check
      _
    $region15: #{tpu_custom_call.1} parent=1 // pred_check_branch
      %59 = sbr.rel (0) target = $region17
    $region16: #{tpu_custom_call.1} parent=1 // pred_region
      %s61 = ssub.s32 16, 16
      %62 = vsyncadd [#allocation7], %s61
      %s64 = sshll.u32 [#allocation6], 4
      %s65 = int_to_ptr.vmem [resolvable:$true] %s64
      %67 = dma.vmem_to_hbm [thread:$0]  %s65, 16, %s2, [#allocation7]
    $region17: #{tpu_custom_call.1} parent=1 // pred_fallthru
      _
    // Predicated region
    $region18: #{tpu_custom_call.1} parent=1 // pred_check
      _
    $region19: #{tpu_custom_call.1} parent=1 // pred_check_branch
      %69 = sbr.rel (0) target = $region21
    $region20: #{tpu_custom_call.1} parent=1 // pred_region
      %s71 = ssub.s32 16, 16
      %72 = vsyncadd [#allocation7], %s71
      %s74 = sshll.u32 [#allocation8], 4
      %s75 = int_to_ptr.vmem [resolvable:$true] %s74
      %77 = dma.vmem_to_hbm [thread:$0]  %s75, 16, %s3, [#allocation7]
    $region21: #{tpu_custom_call.1} parent=1 // pred_fallthru
      _
    // Predicated region
    $region22: #{tpu_custom_call.1} parent=1 // pred_check
      _
    $region23: #{tpu_custom_call.1} parent=1 // pred_check_branch
      %79 = sbr.rel (0) target = $region25
    $region24: #{tpu_custom_call.1} parent=1 // pred_region
      %80 = dma.done [#allocation4], 128
    $region25: #{tpu_custom_call.1} parent=1 // pred_fallthru
      _
    // Predicated region
    $region26: #{tpu_custom_call.1} parent=1 // pred_check
      _
    $region27: #{tpu_custom_call.1} parent=1 // pred_check_branch
      %82 = sbr.rel (0) target = $region29
    $region28: #{tpu_custom_call.1} parent=1 // pred_region
      %83 = dma.done [#allocation7], 16
    $region29: #{tpu_custom_call.1} parent=1 // pred_fallthru
      _
    // Predicated region
    $region30: #{tpu_custom_call.1} parent=1 // pred_check
      _
    $region31: #{tpu_custom_call.1} parent=1 // pred_check_branch
      %85 = sbr.rel (0) target = $region33
    $region32: #{tpu_custom_call.1} parent=1 // pred_region
      %86 = dma.done [#allocation7], 16
    $region33: #{tpu_custom_call.1} parent=1 // pred_fallthru
      _
    %87 = vsyncpa [#allocation3], 1
    %88 = vsyncpa [#allocation4], 1
    %89 = vsyncpa [#allocation7], 1

</llo_original>
